<compile_context>
chip_gen: v5e
topology: v5e:2x2
jax: 0.10.0
libtpu: 0.0.40
codegen_flags: <defaults>
</compile_context>

<pallas_src>
import jax
import jax.numpy as jnp
from jax.experimental import pallas as pl
from jax.experimental.pallas import tpu as pltpu

# ---- model sizes (from the PyTorch module) ----------------------------------
VOCAB_SIZE = 2          # {'START': 0, 'END': 1}
INPUT_SIZE = VOCAB_SIZE # input_size = vocab_size
HIDDEN_SIZE = 50
OUTPUT_SIZE = VOCAB_SIZE
NUM_LAYERS = 1
DROPOUT_P = 0.0         # eval-mode / num_layers==1 -> dropout is identity

BATCH = 2
SEQ = 8

# ---- padded, hardware-friendly sizes ----------------------------------------
B_PAD = 8        # sublane dim of one (8,128) vreg
H_PAD = 128      # lane dim / one MXU tile edge
O_PAD = 128      # lane-dense output slab
V_PAD = 8        # sublane-pad the 2-row input table
T_PAD = 128      # lane-pad the token matrix


def make_rnn_kernel(seq_len):
    def rnn_kernel(tok_ref, table_ref, whh_ref, wfc_ref, bfc_ref, out_ref):
        """Full RNN recurrence over time + final Linear, single program.

        tok_ref:   (B_PAD, T_PAD) int32  tokens (zero padded; cols < seq_len real)
        table_ref: (V_PAD, H_PAD) f32    row v = emb[v] @ W_ih^T + b_ih + b_hh
        whh_ref:   (H_PAD, H_PAD) f32    hidden->hidden weight (transposed, padded)
        wfc_ref:   (H_PAD, O_PAD) f32    fc weight (transposed, padded)
        bfc_ref:   (1, O_PAD)     f32    fc bias (padded)
        out_ref:   (B_PAD, O_PAD) f32
        """
        whh = whh_ref[...]
        tok = tok_ref[...]

        # Hoist the per-vocab row broadcasts out of the loop (VOCAB == 2).
        row0 = jnp.broadcast_to(table_ref[0:1, :], (B_PAD, H_PAD))
        row1 = jnp.broadcast_to(table_ref[1:2, :], (B_PAD, H_PAD))

        h = jnp.zeros((B_PAD, H_PAD), dtype=jnp.float32)

        # Static full unroll over time: one h@W_hh MXU op + EUP tanh per step.
        for t in range(seq_len):
            tok_t = tok[:, t:t + 1]                       # (B_PAD, 1), static slice
            x_t = jnp.where(tok_t == 0, row0, row1)       # fused embed + in-proj + bias
            h = jnp.tanh(x_t + jnp.dot(h, whh,
                                       preferred_element_type=jnp.float32))

        # Dropout with p=0.0 (eval) is identity.
        out_ref[...] = (jnp.dot(h, wfc_ref[...],
                                preferred_element_type=jnp.float32)
                        + bfc_ref[...])

    return rnn_kernel


def init_params(key):
    """Deterministic parameter init matching the PyTorch module's shapes."""
    ks = jax.random.split(key, 7)
    scale = 0.1
    embedding = scale * jax.random.normal(ks[0], (VOCAB_SIZE, INPUT_SIZE), jnp.float32)
    w_ih = scale * jax.random.normal(ks[1], (HIDDEN_SIZE, INPUT_SIZE), jnp.float32)
    w_hh = scale * jax.random.normal(ks[2], (HIDDEN_SIZE, HIDDEN_SIZE), jnp.float32)
    b_ih = scale * jax.random.normal(ks[3], (HIDDEN_SIZE,), jnp.float32)
    b_hh = scale * jax.random.normal(ks[4], (HIDDEN_SIZE,), jnp.float32)
    w_fc = scale * jax.random.normal(ks[5], (OUTPUT_SIZE, HIDDEN_SIZE), jnp.float32)
    b_fc = scale * jax.random.normal(ks[6], (OUTPUT_SIZE,), jnp.float32)
    return {
        "embedding": embedding,
        "w_ih_t": w_ih.T,                       # (D, H)
        "w_hh_t": w_hh.T,                       # (H, H)
        "b_ih": b_ih.reshape(1, HIDDEN_SIZE),   # (1, H)
        "b_hh": b_hh.reshape(1, HIDDEN_SIZE),   # (1, H)
        "w_fc_t": w_fc.T,                       # (H, O)
        "b_fc": b_fc.reshape(1, OUTPUT_SIZE),   # (1, O)
    }


def prepare_padded_params(params):
    """One-time prep: fold embedding @ W_ih + biases into a per-token table and
    zero-pad everything to (8,128)/128x128 shapes.  Zero padding is exact:
    padded hidden units stay 0 and padded W_hh / W_fc rows are 0."""
    table = params["embedding"] @ params["w_ih_t"] + params["b_ih"] + params["b_hh"]
    table_pad = jnp.zeros((V_PAD, H_PAD), jnp.float32)
    table_pad = table_pad.at[:VOCAB_SIZE, :HIDDEN_SIZE].set(table)

    whh_pad = jnp.zeros((H_PAD, H_PAD), jnp.float32)
    whh_pad = whh_pad.at[:HIDDEN_SIZE, :HIDDEN_SIZE].set(params["w_hh_t"])

    wfc_pad = jnp.zeros((H_PAD, O_PAD), jnp.float32)
    wfc_pad = wfc_pad.at[:HIDDEN_SIZE, :OUTPUT_SIZE].set(params["w_fc_t"])

    bfc_pad = jnp.zeros((1, O_PAD), jnp.float32)
    bfc_pad = bfc_pad.at[:, :OUTPUT_SIZE].set(params["b_fc"])

    return {"table": table_pad, "whh": whh_pad, "wfc": wfc_pad, "bfc": bfc_pad}


def rnn_forward(tokens, padded_params):
    """tokens: (B, T) int32 indices into the vocab."""
    B, T = tokens.shape

    # Only per-call wrapper op: pad the tiny int32 token matrix.
    tok_pad = jnp.zeros((B_PAD, T_PAD), jnp.int32)
    tok_pad = tok_pad.at[:B, :T].set(tokens.astype(jnp.int32))

    vmem = pl.BlockSpec(memory_space=pltpu.MemorySpace.VMEM)
    out = pl.pallas_call(
        make_rnn_kernel(T),
        out_shape=jax.ShapeDtypeStruct((B_PAD, O_PAD), jnp.float32),
        in_specs=[vmem] * 5,
        out_specs=vmem,
    )(tok_pad,
      padded_params["table"], padded_params["whh"],
      padded_params["wfc"], padded_params["bfc"])

    return out[:B, :OUTPUT_SIZE]


def rnn_reference(tokens, params):
    """Pure-JAX reference replicating nn.Embedding -> nn.RNN -> last -> Linear."""
    x_emb = jnp.take(params["embedding"], tokens, axis=0)  # (B, T, D)
    B = tokens.shape[0]
    h = jnp.zeros((B, HIDDEN_SIZE), jnp.float32)
    for t in range(tokens.shape[1]):
        h = jnp.tanh(x_emb[:, t, :] @ params["w_ih_t"]
                     + h @ params["w_hh_t"]
                     + params["b_ih"] + params["b_hh"])
    return h @ params["w_fc_t"] + params["b_fc"]


if __name__ == "__main__":
    key = jax.random.PRNGKey(0)
    pkey, dkey = jax.random.split(key)
    params = init_params(pkey)
    padded_params = prepare_padded_params(params)

    tokens = jax.random.randint(dkey, (BATCH, SEQ), 0, VOCAB_SIZE, dtype=jnp.int32)

    out = rnn_forward(tokens, padded_params)
    out = jax.block_until_ready(out)

    ref = rnn_reference(tokens, params)
    assert out.shape == (BATCH, OUTPUT_SIZE)
    assert jnp.allclose(out, ref, atol=1e-5, rtol=1e-5), "mismatch vs reference"

    print("KERNEL_OK")
</pallas_src>

<mosaic_0001>
module attributes {stable_mosaic.version = 11 : i64} {
  func.func @rnn_kernel(%arg0: memref<8x128xi32, #tpu.memory_space<vmem>>, %arg1: memref<8x128xf32, #tpu.memory_space<vmem>>, %arg2: memref<128x128xf32, #tpu.memory_space<vmem>>, %arg3: memref<128x128xf32, #tpu.memory_space<vmem>>, %arg4: memref<1x128xf32, #tpu.memory_space<vmem>>, %arg5: memref<8x128xf32, #tpu.memory_space<vmem>>) attributes {dimension_semantics = [], scalar_prefetch = 0 : i64, scratch_operands = 0 : i64, tpu.core_type = #tpu.core_type<tc>} {
    %c0 = arith.constant 0 : index
    %c0_0 = arith.constant 0 : index
    %0 = vector.load %arg2[%c0, %c0_0] : memref<128x128xf32, #tpu.memory_space<vmem>>, vector<128x128xf32>
    %c0_1 = arith.constant 0 : index
    %c0_2 = arith.constant 0 : index
    %1 = vector.load %arg0[%c0_1, %c0_2] : memref<8x128xi32, #tpu.memory_space<vmem>>, vector<8x128xi32>
    %c0_3 = arith.constant 0 : index
    %c0_4 = arith.constant 0 : index
    %2 = vector.load %arg1[%c0_3, %c0_4] : memref<8x128xf32, #tpu.memory_space<vmem>>, vector<1x128xf32>
    %3 = vector.shape_cast %2 : vector<1x128xf32> to vector<1x128xf32>
    %4 = vector.broadcast %3 : vector<1x128xf32> to vector<8x128xf32>
    %c1 = arith.constant 1 : index
    %c0_5 = arith.constant 0 : index
    %5 = vector.load %arg1[%c1, %c0_5] : memref<8x128xf32, #tpu.memory_space<vmem>>, vector<1x128xf32>
    %6 = vector.shape_cast %5 : vector<1x128xf32> to vector<1x128xf32>
    %7 = vector.broadcast %6 : vector<1x128xf32> to vector<8x128xf32>
    %cst = arith.constant 0.000000e+00 : f32
    %8 = vector.broadcast %cst : f32 to vector<8x128xf32>
    %9 = vector.extract_strided_slice %1 {offsets = [0, 0], sizes = [8, 1], strides = [1, 1]} : vector<8x128xi32> to vector<8x1xi32>
    %c0_i32 = arith.constant 0 : i32
    %10 = vector.broadcast %c0_i32 : i32 to vector<8x1xi32>
    %11 = arith.cmpi eq, %9, %10 : vector<8x1xi32>
    %12 = vector.shape_cast %11 : vector<8x1xi1> to vector<8x1xi1>
    %13 = vector.broadcast %12 : vector<8x1xi1> to vector<8x128xi1>
    %14 = arith.select %13, %4, %7 : vector<8x128xi1>, vector<8x128xf32>
    %cst_6 = arith.constant dense<0.000000e+00> : vector<8x128xf32>
    %15 = tpu.matmul %8, %0, %cst_6 {dimension_numbers = #tpu.dot_dimension_numbers<[1], [0], [0], [1], [0, 0, 1, 1], [], []>} : vector<8x128xf32>, vector<128x128xf32>, vector<8x128xf32> -> vector<8x128xf32>
    %16 = arith.addf %14, %15 : vector<8x128xf32>
    %17 = math.tanh %16 : vector<8x128xf32>
    %18 = vector.extract_strided_slice %1 {offsets = [0, 1], sizes = [8, 1], strides = [1, 1]} : vector<8x128xi32> to vector<8x1xi32>
    %c0_i32_7 = arith.constant 0 : i32
    %19 = vector.broadcast %c0_i32_7 : i32 to vector<8x1xi32>
    %20 = arith.cmpi eq, %18, %19 : vector<8x1xi32>
    %21 = vector.shape_cast %20 : vector<8x1xi1> to vector<8x1xi1>
    %22 = vector.broadcast %21 : vector<8x1xi1> to vector<8x128xi1>
    %23 = arith.select %22, %4, %7 : vector<8x128xi1>, vector<8x128xf32>
    %cst_8 = arith.constant dense<0.000000e+00> : vector<8x128xf32>
    %24 = tpu.matmul %17, %0, %cst_8 {dimension_numbers = #tpu.dot_dimension_numbers<[1], [0], [0], [1], [0, 0, 1, 1], [], []>} : vector<8x128xf32>, vector<128x128xf32>, vector<8x128xf32> -> vector<8x128xf32>
    %25 = arith.addf %23, %24 : vector<8x128xf32>
    %26 = math.tanh %25 : vector<8x128xf32>
    %27 = vector.extract_strided_slice %1 {offsets = [0, 2], sizes = [8, 1], strides = [1, 1]} : vector<8x128xi32> to vector<8x1xi32>
    %c0_i32_9 = arith.constant 0 : i32
    %28 = vector.broadcast %c0_i32_9 : i32 to vector<8x1xi32>
    %29 = arith.cmpi eq, %27, %28 : vector<8x1xi32>
    %30 = vector.shape_cast %29 : vector<8x1xi1> to vector<8x1xi1>
    %31 = vector.broadcast %30 : vector<8x1xi1> to vector<8x128xi1>
    %32 = arith.select %31, %4, %7 : vector<8x128xi1>, vector<8x128xf32>
    %cst_10 = arith.constant dense<0.000000e+00> : vector<8x128xf32>
    %33 = tpu.matmul %26, %0, %cst_10 {dimension_numbers = #tpu.dot_dimension_numbers<[1], [0], [0], [1], [0, 0, 1, 1], [], []>} : vector<8x128xf32>, vector<128x128xf32>, vector<8x128xf32> -> vector<8x128xf32>
    %34 = arith.addf %32, %33 : vector<8x128xf32>
    %35 = math.tanh %34 : vector<8x128xf32>
    %36 = vector.extract_strided_slice %1 {offsets = [0, 3], sizes = [8, 1], strides = [1, 1]} : vector<8x128xi32> to vector<8x1xi32>
    %c0_i32_11 = arith.constant 0 : i32
    %37 = vector.broadcast %c0_i32_11 : i32 to vector<8x1xi32>
    %38 = arith.cmpi eq, %36, %37 : vector<8x1xi32>
    %39 = vector.shape_cast %38 : vector<8x1xi1> to vector<8x1xi1>
    %40 = vector.broadcast %39 : vector<8x1xi1> to vector<8x128xi1>
    %41 = arith.select %40, %4, %7 : vector<8x128xi1>, vector<8x128xf32>
    %cst_12 = arith.constant dense<0.000000e+00> : vector<8x128xf32>
    %42 = tpu.matmul %35, %0, %cst_12 {dimension_numbers = #tpu.dot_dimension_numbers<[1], [0], [0], [1], [0, 0, 1, 1], [], []>} : vector<8x128xf32>, vector<128x128xf32>, vector<8x128xf32> -> vector<8x128xf32>
    %43 = arith.addf %41, %42 : vector<8x128xf32>
    %44 = math.tanh %43 : vector<8x128xf32>
    %45 = vector.extract_strided_slice %1 {offsets = [0, 4], sizes = [8, 1], strides = [1, 1]} : vector<8x128xi32> to vector<8x1xi32>
    %c0_i32_13 = arith.constant 0 : i32
    %46 = vector.broadcast %c0_i32_13 : i32 to vector<8x1xi32>
    %47 = arith.cmpi eq, %45, %46 : vector<8x1xi32>
    %48 = vector.shape_cast %47 : vector<8x1xi1> to vector<8x1xi1>
    %49 = vector.broadcast %48 : vector<8x1xi1> to vector<8x128xi1>
    %50 = arith.select %49, %4, %7 : vector<8x128xi1>, vector<8x128xf32>
    %cst_14 = arith.constant dense<0.000000e+00> : vector<8x128xf32>
    %51 = tpu.matmul %44, %0, %cst_14 {dimension_numbers = #tpu.dot_dimension_numbers<[1], [0], [0], [1], [0, 0, 1, 1], [], []>} : vector<8x128xf32>, vector<128x128xf32>, vector<8x128xf32> -> vector<8x128xf32>
    %52 = arith.addf %50, %51 : vector<8x128xf32>
    %53 = math.tanh %52 : vector<8x128xf32>
    %54 = vector.extract_strided_slice %1 {offsets = [0, 5], sizes = [8, 1], strides = [1, 1]} : vector<8x128xi32> to vector<8x1xi32>
    %c0_i32_15 = arith.constant 0 : i32
    %55 = vector.broadcast %c0_i32_15 : i32 to vector<8x1xi32>
    %56 = arith.cmpi eq, %54, %55 : vector<8x1xi32>
    %57 = vector.shape_cast %56 : vector<8x1xi1> to vector<8x1xi1>
    %58 = vector.broadcast %57 : vector<8x1xi1> to vector<8x128xi1>
    %59 = arith.select %58, %4, %7 : vector<8x128xi1>, vector<8x128xf32>
    %cst_16 = arith.constant dense<0.000000e+00> : vector<8x128xf32>
    %60 = tpu.matmul %53, %0, %cst_16 {dimension_numbers = #tpu.dot_dimension_numbers<[1], [0], [0], [1], [0, 0, 1, 1], [], []>} : vector<8x128xf32>, vector<128x128xf32>, vector<8x128xf32> -> vector<8x128xf32>
    %61 = arith.addf %59, %60 : vector<8x128xf32>
    %62 = math.tanh %61 : vector<8x128xf32>
    %63 = vector.extract_strided_slice %1 {offsets = [0, 6], sizes = [8, 1], strides = [1, 1]} : vector<8x128xi32> to vector<8x1xi32>
    %c0_i32_17 = arith.constant 0 : i32
    %64 = vector.broadcast %c0_i32_17 : i32 to vector<8x1xi32>
    %65 = arith.cmpi eq, %63, %64 : vector<8x1xi32>
    %66 = vector.shape_cast %65 : vector<8x1xi1> to vector<8x1xi1>
    %67 = vector.broadcast %66 : vector<8x1xi1> to vector<8x128xi1>
    %68 = arith.select %67, %4, %7 : vector<8x128xi1>, vector<8x128xf32>
    %cst_18 = arith.constant dense<0.000000e+00> : vector<8x128xf32>
    %69 = tpu.matmul %62, %0, %cst_18 {dimension_numbers = #tpu.dot_dimension_numbers<[1], [0], [0], [1], [0, 0, 1, 1], [], []>} : vector<8x128xf32>, vector<128x128xf32>, vector<8x128xf32> -> vector<8x128xf32>
    %70 = arith.addf %68, %69 : vector<8x128xf32>
    %71 = math.tanh %70 : vector<8x128xf32>
    %72 = vector.extract_strided_slice %1 {offsets = [0, 7], sizes = [8, 1], strides = [1, 1]} : vector<8x128xi32> to vector<8x1xi32>
    %c0_i32_19 = arith.constant 0 : i32
    %73 = vector.broadcast %c0_i32_19 : i32 to vector<8x1xi32>
    %74 = arith.cmpi eq, %72, %73 : vector<8x1xi32>
    %75 = vector.shape_cast %74 : vector<8x1xi1> to vector<8x1xi1>
    %76 = vector.broadcast %75 : vector<8x1xi1> to vector<8x128xi1>
    %77 = arith.select %76, %4, %7 : vector<8x128xi1>, vector<8x128xf32>
    %cst_20 = arith.constant dense<0.000000e+00> : vector<8x128xf32>
    %78 = tpu.matmul %71, %0, %cst_20 {dimension_numbers = #tpu.dot_dimension_numbers<[1], [0], [0], [1], [0, 0, 1, 1], [], []>} : vector<8x128xf32>, vector<128x128xf32>, vector<8x128xf32> -> vector<8x128xf32>
    %79 = arith.addf %77, %78 : vector<8x128xf32>
    %80 = math.tanh %79 : vector<8x128xf32>
    %c0_21 = arith.constant 0 : index
    %c0_22 = arith.constant 0 : index
    %81 = vector.load %arg3[%c0_21, %c0_22] : memref<128x128xf32, #tpu.memory_space<vmem>>, vector<128x128xf32>
    %cst_23 = arith.constant dense<0.000000e+00> : vector<8x128xf32>
    %82 = tpu.matmul %80, %81, %cst_23 {dimension_numbers = #tpu.dot_dimension_numbers<[1], [0], [0], [1], [0, 0, 1, 1], [], []>} : vector<8x128xf32>, vector<128x128xf32>, vector<8x128xf32> -> vector<8x128xf32>
    %c0_24 = arith.constant 0 : index
    %c0_25 = arith.constant 0 : index
    %83 = vector.load %arg4[%c0_24, %c0_25] : memref<1x128xf32, #tpu.memory_space<vmem>>, vector<1x128xf32>
    %84 = vector.broadcast %83 : vector<1x128xf32> to vector<8x128xf32>
    %85 = arith.addf %82, %84 : vector<8x128xf32>
    %c0_26 = arith.constant 0 : index
    %c0_27 = arith.constant 0 : index
    %86 = vector.load %arg5[%c0_26, %c0_27] : memref<8x128xf32, #tpu.memory_space<vmem>>, vector<8x128xf32>
    tpu.vector_store %arg5[%c0_26, %c0_27], %85 {strides = array<i32>} : memref<8x128xf32, #tpu.memory_space<vmem>>, vector<8x128xf32>,
    return
  }
}

</mosaic_0001>

<llo_original>
// kernel: tpu_custom_call.1
$region0: #{tpu_custom_call.1}
  #allocation0 [shape = 'u32[]', space=smem, size = 0x4, offset = 0x4, fixed_abs, tag = 'smem constant byte address 0x4 - core index']
  #allocation1 [shape = 'u32[72,128]{1,0:T(1,128)}', space=vmem, size = 0x9000, scoped, tag = 'internal scratch']
  %s0 = inlined_call_operand.hbm [shape: s32[8,128], index: 0, kind: input, shape index: {}]
  %s1 = inlined_call_operand.hbm [shape: f32[8,128], index: 1, kind: input, shape index: {}]
  %s2 = inlined_call_operand.hbm [shape: f32[128,128], index: 2, kind: input, shape index: {}]
  %s3 = inlined_call_operand.hbm [shape: f32[128,128], index: 3, kind: input, shape index: {}]
  %s4 = inlined_call_operand.vmem [shape: f32[1,128], index: 4, kind: input, shape index: {}]
  %s5 = inlined_call_operand.hbm [shape: f32[8,128], index: 5, kind: output, shape index: {}]
  %s6 = sld [smem:[#allocation0]]
  $region46: #{tpu_custom_call.1} parent=0
    _
  %s8 = ssub.s32 1, %s6
  %s9 = scalar_select 0, %s8, %s6
  $region1: #{tpu_custom_call.1} parent=0
    #allocation2 [shape = 'u8[4096]{0}', space=vmem, size = 0x1000, scoped, tag = 'input window, operand 0, single buffered']
    #allocation3 [shape = 's32[1]{0}', space=sflag, size = 0x4, scoped, tag = 'scoped memory for tpu_custom_call.1']
    #allocation4 [shape = 's32[1]{0}', space=sflag, size = 0x4, scoped, tag = 'scoped memory for tpu_custom_call.1']
    #allocation5 [shape = 'u8[4096]{0}', space=vmem, size = 0x1000, scoped, tag = 'input window, operand 1, single buffered']
    #allocation6 [shape = 's32[1]{0}', space=sflag, size = 0x4, scoped, tag = 'scoped memory for tpu_custom_call.1']
    #allocation7 [shape = 'u8[65536]{0}', space=vmem, size = 0x10000, scoped, tag = 'input window, operand 2, single buffered']
    #allocation8 [shape = 'u8[65536]{0}', space=vmem, size = 0x10000, scoped, tag = 'input window, operand 3, single buffered']
    #allocation9 [shape = 's32[1]{0}', space=sflag, size = 0x4, scoped, tag = 'scoped memory for tpu_custom_call.1']
    #allocation10 [shape = 'u8[4096]{0}', space=vmem, size = 0x1000, scoped, tag = 'output window, operand 0, single buffered']
    %10 = vsyncpa [#allocation3], 0
    %11 = vsyncpa [#allocation6], 0
    %12 = vsyncpa [#allocation9], 0
    %13 = vsyncpa [#allocation4], 0
    // Predicated region
    $region2: #{tpu_custom_call.1} parent=1 // pred_check
      _
    $region3: #{tpu_custom_call.1} parent=1 // pred_check_branch
      %15 = sbr.rel (0) target = $region5
    $region4: #{tpu_custom_call.1} parent=1 // pred_region
      %17 = vsyncadd [#allocation3], 0
      %s19 = sshll.u32 %s0, 4
      %s20 = int_to_ptr.hbm [resolvable:$true] %s19
      %s21 = sshll.u32 [#allocation2], 4
      %s22 = int_to_ptr.vmem [resolvable:$true] %s21
      %24 = dma.hbm_to_vmem [thread:$0]  %s20, 128, %s22, [#allocation3]
    $region5: #{tpu_custom_call.1} parent=1 // pred_fallthru
      _
    // Predicated region
    $region6: #{tpu_custom_call.1} parent=1 // pred_check
      _
    $region7: #{tpu_custom_call.1} parent=1 // pred_check_branch
      %26 = sbr.rel (0) target = $region9
    $region8: #{tpu_custom_call.1} parent=1 // pred_region
      %28 = vsyncadd [#allocation6], 0
      %s30 = sshll.u32 %s1, 4
      %s31 = int_to_ptr.hbm [resolvable:$true] %s30
      %s32 = sshll.u32 [#allocation5], 4
      %s33 = int_to_ptr.vmem [resolvable:$true] %s32
      %35 = dma.hbm_to_vmem [thread:$0]  %s31, 128, %s33, [#allocation6]
    $region9: #{tpu_custom_call.1} parent=1 // pred_fallthru
      _
    // Predicated region
    $region10: #{tpu_custom_call.1} parent=1 // pred_check
      _
    $region11: #{tpu_custom_call.1} parent=1 // pred_check_branch
      %37 = sbr.rel (0) target = $region13
    $region12: #{tpu_custom_call.1} parent=1 // pred_region
      %39 = vsyncadd [#allocation6], 0
      %s40 = sshll.u32 %s2, 4
      %s41 = int_to_ptr.hbm [resolvable:$true] %s40
      %s42 = sshll.u32 [#allocation7], 4
      %s43 = int_to_ptr.vmem [resolvable:$true] %s42
      %48 = dma.hbm_to_vmem [thread:$0]  %s41, 2048, %s43, [#allocation6], 128, 128, 8
    $region13: #{tpu_custom_call.1} parent=1 // pred_fallthru
      _
    // Predicated region
    $region14: #{tpu_custom_call.1} parent=1 // pred_check
      _
    $region15: #{tpu_custom_call.1} parent=1 // pred_check_branch
      %50 = sbr.rel (0) target = $region17
    $region16: #{tpu_custom_call.1} parent=1 // pred_region
      %52 = vsyncadd [#allocation9], 0
      %s53 = sshll.u32 %s3, 4
      %s54 = int_to_ptr.hbm [resolvable:$true] %s53
      %s55 = sshll.u32 [#allocation8], 4
      %s56 = int_to_ptr.vmem [resolvable:$true] %s55
      %61 = dma.hbm_to_vmem [thread:$0]  %s54, 2048, %s56, [#allocation9], 128, 128, 8
    $region17: #{tpu_custom_call.1} parent=1 // pred_fallthru
      _
    // Predicated region
    $region18: #{tpu_custom_call.1} parent=1 // pred_check
      _
    $region19: #{tpu_custom_call.1} parent=1 // pred_check_branch
      %63 = sbr.rel (0) target = $region21
    $region20: #{tpu_custom_call.1} parent=1 // pred_region
      _
    $region21: #{tpu_custom_call.1} parent=1 // pred_fallthru
      _
    // Predicated region
    $region22: #{tpu_custom_call.1} parent=1 // pred_check
      _
    $region23: #{tpu_custom_call.1} parent=1 // pred_check_branch
      %65 = sbr.rel (0) target = $region25
    $region24: #{tpu_custom_call.1} parent=1 // pred_region
      %67 = dma.done [#allocation3], 128
    $region25: #{tpu_custom_call.1} parent=1 // pred_fallthru
      _
    // Predicated region
    $region26: #{tpu_custom_call.1} parent=1 // pred_check
      _
    $region27: #{tpu_custom_call.1} parent=1 // pred_check_branch
      %69 = sbr.rel (0) target = $region29
    $region28: #{tpu_custom_call.1} parent=1 // pred_region
      %71 = dma.done [#allocation6], 128
    $region29: #{tpu_custom_call.1} parent=1 // pred_fallthru
      _
    // Predicated region
    $region30: #{tpu_custom_call.1} parent=1 // pred_check
      _
    $region31: #{tpu_custom_call.1} parent=1 // pred_check_branch
      %73 = sbr.rel (0) target = $region33
    $region32: #{tpu_custom_call.1} parent=1 // pred_region
      %75 = dma.done [#allocation6], 2048
    $region33: #{tpu_custom_call.1} parent=1 // pred_fallthru
      _
    // Predicated region
    $region34: #{tpu_custom_call.1} parent=1 // pred_check
      _
    $region35: #{tpu_custom_call.1} parent=1 // pred_check_branch
      %77 = sbr.rel (0) target = $region37
    $region36: #{tpu_custom_call.1} parent=1 // pred_region
      %79 = dma.done [#allocation9], 2048
    $region37: #{tpu_custom_call.1} parent=1 // pred_fallthru
      _
    %v80 = vld [vmem:[#allocation7] sm:$0xff]
    %v81 = vld [vmem:[#allocation7 + $0x8] sm:$0xff]
    %v82 = vld [vmem:[#allocation7 + $0x10] sm:$0xff]
    %v83 = vld [vmem:[#allocation7 + $0x18] sm:$0xff]
    %v84 = vld [vmem:[#allocation7 + $0x20] sm:$0xff]
    %v85 = vld [vmem:[#allocation7 + $0x28] sm:$0xff]
    %v86 = vld [vmem:[#allocation7 + $0x30] sm:$0xff]
    %v87 = vld [vmem:[#allocation7 + $0x38] sm:$0xff]
    %v88 = vld [vmem:[#allocation7 + $0x40] sm:$0xff]
    %v89 = vld [vmem:[#allocation7 + $0x48] sm:$0xff]
    %v90 = vld [vmem:[#allocation7 + $0x50] sm:$0xff]
    %v91 = vld [vmem:[#allocation7 + $0x58] sm:$0xff]
    %v92 = vld [vmem:[#allocation7 + $0x60] sm:$0xff]
    %v93 = vld [vmem:[#allocation7 + $0x68] sm:$0xff]
    %v94 = vld [vmem:[#allocation7 + $0x70] sm:$0xff]
    %v95 = vld [vmem:[#allocation7 + $0x78] sm:$0xff]
    %v96 = vld [vmem:[#allocation2] sm:$0xff]
    %v97 = vld [vmem:[#allocation5] sm:$0x1]
    %v98 = vperm.slane %v97, 0
    %v99 = vld [vmem:[#allocation5 + $0x1] sm:$0x1]
    %v100 = vperm.slane %v99, 0
    %vm101 = vcmp.eq.s32.totalorder %v96, 0
    %v102 = vsel %vm101, 1, 0
    %103 = vset.pattern.permute.xlu0 0
    %104 = vperm.xlu0 %103, %v102
    %v105 = vpop.permute.xlu0 %104
    %vm106 = vcmp.eq.s32.totalorder %v105, 1
    %v107 = vsel %vm106, %v98, %v100
    %108 = vmatpush.msra.mxu0 %v95
    %109 = vmatpush.msra.mxu0 %v94
    %110 = vmatpush.msra.mxu0 %v93
    %111 = vmatpush.msra.mxu0 %v92
    %112 = vmatpush.msra.mxu0 %v91
    %113 = vmatpush.msra.mxu0 %v90
    %114 = vmatpush.msra.mxu0 %v89
    %115 = vmatpush.msra.mxu0 %v88
    %116 = vmatpush.msra.mxu0 %v87
    %117 = vmatpush.msra.mxu0 %v86
    %118 = vmatpush.msra.mxu0 %v85
    %119 = vmatpush.msra.mxu0 %v84
    %120 = vmatpush.msra.mxu0 %v83
    %121 = vmatpush.msra.mxu0 %v82
    %122 = vmatpush.msra.mxu0 %v81
    %123 = vmatpush.msra.mxu0 %v80
    %124 = vmatmul.f32.gmra.mxu0 0.0
    %v125 = vpop.f32.mrf.mxu0
    %v126 = vadd.f32 0.0, %v125
    %127 = vdwg.mxu0
    %v128 = vadd.f32 %v107, %v126
    %v129 = vtanh.pop %v128
    %130 = vset.pattern.permute.xlu0 1
    %131 = vperm.xlu0 %130, %v102
    %v132 = vpop.permute.xlu0 %131
    %vm133 = vcmp.eq.s32.totalorder %v132, 1
    %v134 = vsel %vm133, %v98, %v100
    %135 = vmatpush.msra.mxu0 %v95
    %136 = vmatpush.msra.mxu0 %v94
    %137 = vmatpush.msra.mxu0 %v93
    %138 = vmatpush.msra.mxu0 %v92
    %139 = vmatpush.msra.mxu0 %v91
    %140 = vmatpush.msra.mxu0 %v90
    %141 = vmatpush.msra.mxu0 %v89
    %142 = vmatpush.msra.mxu0 %v88
    %143 = vmatpush.msra.mxu0 %v87
    %144 = vmatpush.msra.mxu0 %v86
    %145 = vmatpush.msra.mxu0 %v85
    %146 = vmatpush.msra.mxu0 %v84
    %147 = vmatpush.msra.mxu0 %v83
    %148 = vmatpush.msra.mxu0 %v82
    %149 = vmatpush.msra.mxu0 %v81
    %150 = vmatpush.msra.mxu0 %v80
    %151 = vmatmul.f32.gmra.mxu0 %v129
    %v152 = vpop.f32.mrf.mxu0
    %v153 = vadd.f32 0.0, %v152
    %154 = vdwg.mxu0
    %v155 = vadd.f32 %v134, %v153
    %v156 = vtanh.pop %v155
    %157 = vset.pattern.permute.xlu0 2
    %158 = vperm.xlu0 %157, %v102
    %v159 = vpop.permute.xlu0 %158
    %vm160 = vcmp.eq.s32.totalorder %v159, 1
    %v161 = vsel %vm160, %v98, %v100
    %162 = vmatpush.msra.mxu0 %v95
    %163 = vmatpush.msra.mxu0 %v94
    %164 = vmatpush.msra.mxu0 %v93
    %165 = vmatpush.msra.mxu0 %v92
    %166 = vmatpush.msra.mxu0 %v91
    %167 = vmatpush.msra.mxu0 %v90
    %168 = vmatpush.msra.mxu0 %v89
    %169 = vmatpush.msra.mxu0 %v88
    %170 = vmatpush.msra.mxu0 %v87
    %171 = vmatpush.msra.mxu0 %v86
    %172 = vmatpush.msra.mxu0 %v85
    %173 = vmatpush.msra.mxu0 %v84
    %174 = vmatpush.msra.mxu0 %v83
    %175 = vmatpush.msra.mxu0 %v82
    %176 = vmatpush.msra.mxu0 %v81
    %177 = vmatpush.msra.mxu0 %v80
    %178 = vmatmul.f32.gmra.mxu0 %v156
    %v179 = vpop.f32.mrf.mxu0
    %v180 = vadd.f32 0.0, %v179
    %181 = vdwg.mxu0
    %v182 = vadd.f32 %v161, %v180
    %v183 = vtanh.pop %v182
    %184 = vset.pattern.permute.xlu0 3
    %185 = vperm.xlu0 %184, %v102
    %v186 = vpop.permute.xlu0 %185
    %vm187 = vcmp.eq.s32.totalorder %v186, 1
    %v188 = vsel %vm187, %v98, %v100
    %189 = vmatpush.msra.mxu0 %v95
    %190 = vmatpush.msra.mxu0 %v94
    %191 = vmatpush.msra.mxu0 %v93
    %192 = vmatpush.msra.mxu0 %v92
    %193 = vmatpush.msra.mxu0 %v91
    %194 = vmatpush.msra.mxu0 %v90
    %195 = vmatpush.msra.mxu0 %v89
    %196 = vmatpush.msra.mxu0 %v88
    %197 = vmatpush.msra.mxu0 %v87
    %198 = vmatpush.msra.mxu0 %v86
    %199 = vmatpush.msra.mxu0 %v85
    %200 = vmatpush.msra.mxu0 %v84
    %201 = vmatpush.msra.mxu0 %v83
    %202 = vmatpush.msra.mxu0 %v82
    %203 = vmatpush.msra.mxu0 %v81
    %204 = vmatpush.msra.mxu0 %v80
    %205 = vmatmul.f32.gmra.mxu0 %v183
    %v206 = vpop.f32.mrf.mxu0
    %v207 = vadd.f32 0.0, %v206
    %208 = vdwg.mxu0
    %v209 = vadd.f32 %v188, %v207
    %v210 = vtanh.pop %v209
    %211 = vset.pattern.permute.xlu0 4
    %212 = vperm.xlu0 %211, %v102
    %v213 = vpop.permute.xlu0 %212
    %vm214 = vcmp.eq.s32.totalorder %v213, 1
    %v215 = vsel %vm214, %v98, %v100
    %216 = vmatpush.msra.mxu0 %v95
    %217 = vmatpush.msra.mxu0 %v94
    %218 = vmatpush.msra.mxu0 %v93
    %219 = vmatpush.msra.mxu0 %v92
    %220 = vmatpush.msra.mxu0 %v91
    %221 = vmatpush.msra.mxu0 %v90
    %222 = vmatpush.msra.mxu0 %v89
    %223 = vmatpush.msra.mxu0 %v88
    %224 = vmatpush.msra.mxu0 %v87
    %225 = vmatpush.msra.mxu0 %v86
    %226 = vmatpush.msra.mxu0 %v85
    %227 = vmatpush.msra.mxu0 %v84
    %228 = vmatpush.msra.mxu0 %v83
    %229 = vmatpush.msra.mxu0 %v82
    %230 = vmatpush.msra.mxu0 %v81
    %231 = vmatpush.msra.mxu0 %v80
    %232 = vmatmul.f32.gmra.mxu0 %v210
    %v233 = vpop.f32.mrf.mxu0
    %v234 = vadd.f32 0.0, %v233
    %235 = vdwg.mxu0
    %v236 = vadd.f32 %v215, %v234
    %v237 = vtanh.pop %v236
    %238 = vset.pattern.permute.xlu0 5
    %239 = vperm.xlu0 %238, %v102
    %v240 = vpop.permute.xlu0 %239
    %vm241 = vcmp.eq.s32.totalorder %v240, 1
    %v242 = vsel %vm241, %v98, %v100
    %243 = vmatpush.msra.mxu0 %v95
    %244 = vmatpush.msra.mxu0 %v94
    %245 = vmatpush.msra.mxu0 %v93
    %246 = vmatpush.msra.mxu0 %v92
    %247 = vmatpush.msra.mxu0 %v91
    %248 = vmatpush.msra.mxu0 %v90
    %249 = vmatpush.msra.mxu0 %v89
    %250 = vmatpush.msra.mxu0 %v88
    %251 = vmatpush.msra.mxu0 %v87
    %252 = vmatpush.msra.mxu0 %v86
    %253 = vmatpush.msra.mxu0 %v85
    %254 = vmatpush.msra.mxu0 %v84
    %255 = vmatpush.msra.mxu0 %v83
    %256 = vmatpush.msra.mxu0 %v82
    %257 = vmatpush.msra.mxu0 %v81
    %258 = vmatpush.msra.mxu0 %v80
    %259 = vmatmul.f32.gmra.mxu0 %v237
    %v260 = vpop.f32.mrf.mxu0
    %v261 = vadd.f32 0.0, %v260
    %262 = vdwg.mxu0
    %v263 = vadd.f32 %v242, %v261
    %v264 = vtanh.pop %v263
    %265 = vset.pattern.permute.xlu0 6
    %266 = vperm.xlu0 %265, %v102
    %v267 = vpop.permute.xlu0 %266
    %vm268 = vcmp.eq.s32.totalorder %v267, 1
    %v269 = vsel %vm268, %v98, %v100
    %270 = vmatpush.msra.mxu0 %v95
    %271 = vmatpush.msra.mxu0 %v94
    %272 = vmatpush.msra.mxu0 %v93
    %273 = vmatpush.msra.mxu0 %v92
    %274 = vmatpush.msra.mxu0 %v91
    %275 = vmatpush.msra.mxu0 %v90
    %276 = vmatpush.msra.mxu0 %v89
    %277 = vmatpush.msra.mxu0 %v88
    %278 = vmatpush.msra.mxu0 %v87
    %279 = vmatpush.msra.mxu0 %v86
    %280 = vmatpush.msra.mxu0 %v85
    %281 = vmatpush.msra.mxu0 %v84
    %282 = vmatpush.msra.mxu0 %v83
    %283 = vmatpush.msra.mxu0 %v82
    %284 = vmatpush.msra.mxu0 %v81
    %285 = vmatpush.msra.mxu0 %v80
    %286 = vmatmul.f32.gmra.mxu0 %v264
    %v287 = vpop.f32.mrf.mxu0
    %v288 = vadd.f32 0.0, %v287
    %289 = vdwg.mxu0
    %v290 = vadd.f32 %v269, %v288
    %v291 = vtanh.pop %v290
    %292 = vset.pattern.permute.xlu0 7
    %293 = vperm.xlu0 %292, %v102
    %v294 = vpop.permute.xlu0 %293
    %vm295 = vcmp.eq.s32.totalorder %v294, 1
    %v296 = vsel %vm295, %v98, %v100
    %297 = vmatpush.msra.mxu0 %v95
    %298 = vmatpush.msra.mxu0 %v94
    %299 = vmatpush.msra.mxu0 %v93
    %300 = vmatpush.msra.mxu0 %v92
    %301 = vmatpush.msra.mxu0 %v91
    %302 = vmatpush.msra.mxu0 %v90
    %303 = vmatpush.msra.mxu0 %v89
    %304 = vmatpush.msra.mxu0 %v88
    %305 = vmatpush.msra.mxu0 %v87
    %306 = vmatpush.msra.mxu0 %v86
    %307 = vmatpush.msra.mxu0 %v85
    %308 = vmatpush.msra.mxu0 %v84
    %309 = vmatpush.msra.mxu0 %v83
    %310 = vmatpush.msra.mxu0 %v82
    %311 = vmatpush.msra.mxu0 %v81
    %312 = vmatpush.msra.mxu0 %v80
    %313 = vmatmul.f32.gmra.mxu0 %v291
    %v314 = vpop.f32.mrf.mxu0
    %v315 = vadd.f32 0.0, %v314
    %316 = vdwg.mxu0
    %v317 = vadd.f32 %v296, %v315
    %v318 = vtanh.pop %v317
    %v319 = vld [vmem:[#allocation8] sm:$0xff]
    %v320 = vld [vmem:[#allocation8 + $0x8] sm:$0xff]
    %v321 = vld [vmem:[#allocation8 + $0x10] sm:$0xff]
    %v322 = vld [vmem:[#allocation8 + $0x18] sm:$0xff]
    %v323 = vld [vmem:[#allocation8 + $0x20] sm:$0xff]
    %v324 = vld [vmem:[#allocation8 + $0x28] sm:$0xff]
    %v325 = vld [vmem:[#allocation8 + $0x30] sm:$0xff]
    %v326 = vld [vmem:[#allocation8 + $0x38] sm:$0xff]
    %v327 = vld [vmem:[#allocation8 + $0x40] sm:$0xff]
    %v328 = vld [vmem:[#allocation8 + $0x48] sm:$0xff]
    %v329 = vld [vmem:[#allocation8 + $0x50] sm:$0xff]
    %v330 = vld [vmem:[#allocation8 + $0x58] sm:$0xff]
    %v331 = vld [vmem:[#allocation8 + $0x60] sm:$0xff]
    %v332 = vld [vmem:[#allocation8 + $0x68] sm:$0xff]
    %v333 = vld [vmem:[#allocation8 + $0x70] sm:$0xff]
    %v334 = vld [vmem:[#allocation8 + $0x78] sm:$0xff]
    %v335 = vld [vmem:[%s4] sm:$0x1]
    %v337 = vperm.slane %v335, 0
    %339 = vmatpush.msra.mxu0 %v334
    %340 = vmatpush.msra.mxu0 %v333
    %341 = vmatpush.msra.mxu0 %v332
    %342 = vmatpush.msra.mxu0 %v331
    %343 = vmatpush.msra.mxu0 %v330
    %344 = vmatpush.msra.mxu0 %v329
    %345 = vmatpush.msra.mxu0 %v328
    %346 = vmatpush.msra.mxu0 %v327
    %347 = vmatpush.msra.mxu0 %v326
    %348 = vmatpush.msra.mxu0 %v325
    %349 = vmatpush.msra.mxu0 %v324
    %350 = vmatpush.msra.mxu0 %v323
    %351 = vmatpush.msra.mxu0 %v322
    %352 = vmatpush.msra.mxu0 %v321
    %353 = vmatpush.msra.mxu0 %v320
    %354 = vmatpush.msra.mxu0 %v319
    %355 = vmatmul.f32.gmra.mxu0 %v318
    %v356 = vpop.f32.mrf.mxu0
    %v357 = vadd.f32 %v337, %v356
    %358 = vdwg.mxu0
    %359 = vst [vmem:[#allocation10] sm:$0xff] %v357
    // Predicated region
    $region38: #{tpu_custom_call.1} parent=1 // pred_check
      _
    $region39: #{tpu_custom_call.1} parent=1 // pred_check_branch
      %361 = sbr.rel (0) target = $region41
    $region40: #{tpu_custom_call.1} parent=1 // pred_region
      %363 = vsyncadd [#allocation4], 0
      %s365 = sshll.u32 [#allocation10], 4
      %s366 = int_to_ptr.vmem [resolvable:$true] %s365
      %s367 = sshll.u32 %s5, 4
      %s368 = int_to_ptr.hbm [resolvable:$true] %s367
      %370 = dma.vmem_to_hbm [thread:$0]  %s366, 128, %s368, [#allocation4]
    $region41: #{tpu_custom_call.1} parent=1 // pred_fallthru
      _
    // Predicated region
    $region42: #{tpu_custom_call.1} parent=1 // pred_check
      _
    $region43: #{tpu_custom_call.1} parent=1 // pred_check_branch
      %372 = sbr.rel (0) target = $region45
    $region44: #{tpu_custom_call.1} parent=1 // pred_region
      %374 = dma.done [#allocation4], 128
    $region45: #{tpu_custom_call.1} parent=1 // pred_fallthru
      _
    %375 = vsyncpa [#allocation3], 1
    %376 = vsyncpa [#allocation6], 1
    %377 = vsyncpa [#allocation9], 1
    %378 = vsyncpa [#allocation4], 1

</llo_original>
